<compile_context>
chip_gen: v6e
topology: v6e:2x2x1
jax: 0.10.0
libtpu: 0.0.40
codegen_flags: <defaults>
</compile_context>

<pallas_src>
import math

import jax
import jax.numpy as jnp
from jax.experimental import pallas as pl
from jax.experimental.pallas import tpu as pltpu

_LANE = 128  # lane width / MXU-friendly padding multiple


def _round_up(x, m):
    return ((x + m - 1) // m) * m


def _tpu_config():
    """(tile_i, tile_j, vmem_limit_bytes) from the detected VMEM capacity.

    128 MiB parts (v5e/v6e): tile_i=256 amortizes the ~0.35 us per-step cost.
    64 MiB parts (v7x): stay at 128x128.
    """
    try:
        vmem_bytes = pltpu.get_tpu_info().vmem_capacity_bytes
    except Exception:
        vmem_bytes = 64 * 1024 * 1024  # conservative (v7x) fallback
    if vmem_bytes >= 100 * 1024 * 1024:
        return 256, 128, 96 * 1024 * 1024
    return 128, 128, 48 * 1024 * 1024


# ---------------------------------------------------------------------------
# Stage 1: per-batch node projection  a_i = node @ W1i + b1 ; a_j = node @ W1j
# ---------------------------------------------------------------------------
def _node_projection_kernel(node_ref, w1_ref, b1_ref, a_i_ref, a_j_ref):
    # node_ref: (1, Sp, Hp) f32   w1_ref: (Hp, 2*Hp) bf16   b1_ref: (1, Hp) f32
    # a_i_ref / a_j_ref: (1, Sp, Hp) compute-dtype outputs
    hp = a_i_ref.shape[2]
    node_bf = node_ref[0].astype(jnp.bfloat16)                       # (Sp, Hp)
    a = jnp.dot(node_bf, w1_ref[...],
                preferred_element_type=jnp.float32)                  # (Sp, 2Hp)
    # Fold b1 into the node_i projection once per batch element.
    a_i_ref[0] = (a[:, :hp] + b1_ref[0][None, :]).astype(a_i_ref.dtype)
    a_j_ref[0] = a[:, hp:].astype(a_j_ref.dtype)


def _project_nodes(node_p, w1cat, b1, compute_dtype):
    B, sp, hp = node_p.shape
    csz = jnp.dtype(compute_dtype).itemsize
    flops = int(2 * B * sp * hp * (2 * hp))
    bytes_accessed = int(4 * node_p.size + 2 * w1cat.size + 4 * b1.size
                         + 2 * B * sp * hp * csz)
    return pl.pallas_call(
        _node_projection_kernel,
        out_shape=(jax.ShapeDtypeStruct((B, sp, hp), compute_dtype),
                   jax.ShapeDtypeStruct((B, sp, hp), compute_dtype)),
        grid=(B,),
        in_specs=[
            pl.BlockSpec((1, sp, hp), lambda b: (b, 0, 0)),     # node (padded)
            pl.BlockSpec((hp, 2 * hp), lambda b: (0, 0)),       # [W1i | W1j] bf16
            pl.BlockSpec((1, hp), lambda b: (0, 0)),            # b1
        ],
        out_specs=(pl.BlockSpec((1, sp, hp), lambda b: (b, 0, 0)),
                   pl.BlockSpec((1, sp, hp), lambda b: (b, 0, 0))),
        compiler_params=pltpu.CompilerParams(
            dimension_semantics=("parallel",)),
        cost_estimate=pl.CostEstimate(flops=flops, transcendentals=0,
                                      bytes_accessed=bytes_accessed),
    )(node_p, w1cat, b1)


# ---------------------------------------------------------------------------
# Stage 2: pairwise MLP over (i, j) tiles
# ---------------------------------------------------------------------------
def _pairwise_scorer_kernel(a_i_ref, a_j_ref, prior_ref,
                            w1p_ref, w2_ref, b2_ref, w3_ref, b3_ref,
                            out_ref):
    # a_i_ref : (1, TI, Hp) cdt     a_j_ref : (1, TJ, Hp) cdt
    # prior_ref: (1, TI, TJ) f32    w1p_ref : (1, Hp) f32
    # w2_ref  : (Hp, H2p) bf16      b2_ref / w3_ref : (1, H2p) f32
    # b3_ref  : (1, 1) f32 (SMEM)   out_ref : (1, TI, TJ) f32
    ti = out_ref.shape[1]
    tj = out_ref.shape[2]
    hp = a_i_ref.shape[2]
    cdt = a_i_ref.dtype            # elementwise compute dtype (bf16 on v6e/v7x)
    zero = jnp.zeros((), cdt)

    a_i = a_i_ref[0]                                                  # (TI, Hp)
    a_j = a_j_ref[0]                                                  # (TJ, Hp)
    prior = prior_ref[0].astype(cdt)                                  # (TI, TJ)
    w1p = w1p_ref[0].astype(cdt)                                      # (Hp,)

    # First Linear: pre1[p,q,:] = a_i[p] + a_j[q] + prior[p,q] * w1p.
    # Done entirely in cdt (bf16 halves vregs for the lane-splat of prior and
    # the two broadcast adds on v6e/v7x).
    pre1 = (a_i[:, None, :]
            + a_j[None, :, :]
            + prior[:, :, None] * w1p[None, None, :])                 # (TI,TJ,Hp)
    h1 = jnp.maximum(pre1, zero).astype(jnp.bfloat16)

    # Second Linear: one lane-dense bf16 MXU matmul on the flattened pair tile
    # (f32 accumulation).
    h2 = jnp.dot(h1.reshape(ti * tj, hp), w2_ref[...],
                 preferred_element_type=jnp.float32)                  # (TI*TJ,H2p)
    h2 = jnp.maximum(h2.astype(cdt) + b2_ref[0].astype(cdt)[None, :], zero)

    # Final Linear (H2p -> 1) as a weighted last-axis reduction on the 3-D
    # view so the result lands directly in lane-dense (TI, TJ) layout.
    h2p = h2.shape[-1]
    prod = h2.reshape(ti, tj, h2p) * w3_ref[0].astype(cdt)[None, None, :]
    score = jnp.sum(prod, axis=-1).astype(jnp.float32) + b3_ref[0, 0]
    out_ref[0] = score


def pairwise_scorer(node_features, bp_priors, kernel_params, *,
                    tile_i=None, tile_j=None, compute_dtype=jnp.bfloat16,
                    vmem_limit_bytes=None, return_padded=False):
    """node_features: [B,S,H] f32, bp_priors: [B,S,S] f32 -> [B,S,S] f32.

    compute_dtype: dtype of the elementwise broadcast/ReLU stage and the final
      lane reduce. bf16 (default) for v6e/v7x (bf16 VALUs); pass jnp.float32
      on v5e which has no bf16 VPU.
    return_padded: skip the trailing [:, :S, :S] slice and return the padded
      (B, sp, sp) array (padded rows/cols hold garbage and must never be
      consumed unsliced) -- reclaims the post-kernel HBM copy when the
      consumer can index the padded array directly.
    """
    B, S, H = node_features.shape
    w1cat, w1p, b1, w2, b2, w3, b3 = kernel_params
    Hp = w1cat.shape[0]
    H2p = w2.shape[1]
    assert w1cat.shape == (Hp, 2 * Hp) and Hp >= H

    ti_auto, tj_auto, vmem_auto = _tpu_config()
    tile_i = ti_auto if tile_i is None else tile_i
    tile_j = tj_auto if tile_j is None else tile_j
    if vmem_limit_bytes is None:
        vmem_limit_bytes = vmem_auto
    # Don't let tiles exceed the padded problem size for small S.
    tile_i = min(tile_i, _round_up(S, _LANE))
    tile_j = min(tile_j, _round_up(S, _LANE))

    sp = _round_up(S, math.lcm(tile_i, tile_j))
    node_p = jnp.pad(node_features, ((0, 0), (0, sp - S), (0, Hp - H)))
    prior_p = jnp.pad(bp_priors, ((0, 0), (0, sp - S), (0, sp - S)))

    # Stage 1: hoisted per-batch projection. After this, every (b, i, j) pair
    # tile is independent, so the pair kernel's whole grid is parallel.
    a_i, a_j = _project_nodes(node_p, w1cat, b1, compute_dtype)

    n_i = sp // tile_i
    n_j = sp // tile_j
    csz = jnp.dtype(compute_dtype).itemsize

    # Advisory cost estimate for XLA's scheduler.
    flops = int(B * sp * sp * (4 * Hp + 2 * Hp * H2p + 3 * H2p))
    bytes_accessed = int(B * sp * Hp * csz * (n_i + n_j)      # a_i / a_j tiles
                         + 8 * B * sp * sp                    # prior + out (f32)
                         + 2 * w2.size
                         + 4 * (w1p.size + b2.size + w3.size + b3.size))

    out_p = pl.pallas_call(
        _pairwise_scorer_kernel,
        out_shape=jax.ShapeDtypeStruct((B, sp, sp), jnp.float32),
        grid=(B, n_i, n_j),
        in_specs=[
            pl.BlockSpec((1, tile_i, Hp), lambda b, i, j: (b, i, 0)),      # a_i
            pl.BlockSpec((1, tile_j, Hp), lambda b, i, j: (b, j, 0)),      # a_j
            pl.BlockSpec((1, tile_i, tile_j), lambda b, i, j: (b, i, j)),  # prior
            pl.BlockSpec((1, Hp), lambda b, i, j: (0, 0)),                 # w1p
            pl.BlockSpec((Hp, H2p), lambda b, i, j: (0, 0)),               # W2 bf16
            pl.BlockSpec((1, H2p), lambda b, i, j: (0, 0)),                # b2
            pl.BlockSpec((1, H2p), lambda b, i, j: (0, 0)),                # w3
            pl.BlockSpec((1, 1), lambda b, i, j: (0, 0),
                         memory_space=pltpu.MemorySpace.SMEM),             # b3
        ],
        out_specs=pl.BlockSpec((1, tile_i, tile_j), lambda b, i, j: (b, i, j)),
        compiler_params=pltpu.CompilerParams(
            # All tiles are independent after the hoist -> every grid axis is
            # "parallel" (v7x's 2 TCs are used even when B == 1).
            dimension_semantics=("parallel", "parallel", "parallel"),
            vmem_limit_bytes=vmem_limit_bytes,
        ),
        cost_estimate=pl.CostEstimate(flops=flops, transcendentals=0,
                                      bytes_accessed=bytes_accessed),
    )(a_i, a_j, prior_p, w1p, w2, b2, w3, b3)

    if return_padded:
        return out_p
    return out_p[:, :S, :S]


def init_raw_params(key, hidden_dim):
    """Synthetic parameters with the exact nn.Linear shapes of the module."""
    H = hidden_dim
    H2 = H // 2
    in1 = 2 * H + 1  # use_prior=True
    ks = jax.random.split(key, 6)
    W1 = jax.random.normal(ks[0], (in1, H), jnp.float32) * 0.1
    b1 = jax.random.normal(ks[1], (H,), jnp.float32) * 0.1
    W2 = jax.random.normal(ks[2], (H, H2), jnp.float32) * 0.1
    b2 = jax.random.normal(ks[3], (H2,), jnp.float32) * 0.1
    W3 = jax.random.normal(ks[4], (H2, 1), jnp.float32) * 0.1
    b3 = jax.random.normal(ks[5], (1,), jnp.float32) * 0.1
    return (W1, b1, W2, b2, W3, b3)


def prepare_kernel_params(raw_params):
    """Split / zero-pad / cast the module weights for the Pallas kernels.

    Zero padding H -> Hp and H//2 -> H2p (multiples of 128) is exact: padded
    node columns, weight rows/cols and biases are all zero so they contribute
    nothing. MXU operands (W1, W2) are cast to bf16 (f32 accumulation).
    """
    W1, b1, W2, b2, W3, b3 = raw_params
    H, H2 = W2.shape
    Hp = _round_up(H, _LANE)
    H2p = _round_up(H2, _LANE)

    W1i = W1[:H, :]          # acts on node_i
    W1j = W1[H:2 * H, :]     # acts on node_j
    w1p = W1[2 * H, :]       # acts on the prior (row vector)

    def pad2(m, r, c):
        return jnp.pad(m, ((0, r - m.shape[0]), (0, c - m.shape[1])))

    w1cat = jnp.concatenate([pad2(W1i, Hp, Hp), pad2(W1j, Hp, Hp)],
                            axis=1).astype(jnp.bfloat16)                # (Hp, 2Hp)
    w1p_p = jnp.pad(w1p, (0, Hp - H)).reshape(1, Hp)
    b1_p = jnp.pad(b1, (0, Hp - H)).reshape(1, Hp)
    W2_p = pad2(W2, Hp, H2p).astype(jnp.bfloat16)                       # (Hp, H2p)
    b2_p = jnp.pad(b2, (0, H2p - H2)).reshape(1, H2p)
    w3_p = jnp.pad(W3[:, 0], (0, H2p - H2)).reshape(1, H2p)
    b3_p = b3.reshape(1, 1)
    return (w1cat, w1p_p, b1_p, W2_p, b2_p, w3_p, b3_p)


def reference(node_features, bp_priors, raw_params):
    """Plain-JAX f32 reference mirroring the PyTorch forward exactly."""
    W1, b1, W2, b2, W3, b3 = raw_params
    B, S, H = node_features.shape
    node_i = jnp.broadcast_to(node_features[:, :, None, :], (B, S, S, H))
    node_j = jnp.broadcast_to(node_features[:, None, :, :], (B, S, S, H))
    pair = jnp.concatenate([node_i, node_j, bp_priors[..., None]], axis=-1)
    flat = pair.reshape(B * S * S, -1)
    h = jnp.maximum(flat @ W1 + b1, 0.0)
    h = jnp.maximum(h @ W2 + b2, 0.0)
    out = h @ W3 + b3
    return out.reshape(B, S, S)


if __name__ == "__main__":
    key = jax.random.PRNGKey(0)

    # (B, S, H): a tiny case plus one that exercises multi-tile + padding paths.
    for (B, S, H) in [(2, 8, 32), (1, 200, 32)]:
        k_node, k_prior, k_param, key = jax.random.split(key, 4)
        node_features = jax.random.normal(k_node, (B, S, H), jnp.float32)
        bp_priors = jax.nn.sigmoid(
            jax.random.normal(k_prior, (B, S, S), jnp.float32))

        raw_params = init_raw_params(k_param, H)
        kparams = prepare_kernel_params(raw_params)
        ref = reference(node_features, bp_priors, raw_params)

        # Default path: bf16 elementwise (v6e/v7x).
        bp_scores = pairwise_scorer(node_features, bp_priors, kparams)
        bp_scores = jax.block_until_ready(bp_scores)
        assert bp_scores.shape == (B, S, S)
        # bf16 MXU operands + bf16 elementwise (f32 accumulation) -> loose tol.
        assert jnp.allclose(bp_scores, ref, atol=2e-2, rtol=2e-2), \
            f"bf16 path mismatch vs reference at shape {(B, S, H)}"

        # v5e-style path (no bf16 VALU): f32 elementwise, same kernel code.
        if (B, S, H) == (2, 8, 32):
            bp_scores_f32 = pairwise_scorer(node_features, bp_priors, kparams,
                                            compute_dtype=jnp.float32)
            bp_scores_f32 = jax.block_until_ready(bp_scores_f32)
            assert jnp.allclose(bp_scores_f32, ref, atol=2e-2, rtol=2e-2), \
                f"f32 path mismatch vs reference at shape {(B, S, H)}"

    print("KERNEL_OK")
</pallas_src>

<mosaic_0001>
module attributes {stable_mosaic.version = 11 : i64} {
  func.func @_node_projection_kernel(%arg0: i32, %arg1: memref<1x128x128xf32, #tpu.memory_space<vmem>>, %arg2: memref<128x256xbf16, #tpu.memory_space<vmem>>, %arg3: memref<1x128xf32, #tpu.memory_space<vmem>>, %arg4: memref<1x128x128xbf16, #tpu.memory_space<vmem>>, %arg5: memref<1x128x128xbf16, #tpu.memory_space<vmem>>) attributes {dimension_semantics = [#tpu.dimension_semantics<parallel>], iteration_bounds = array<i64: 2>, scalar_prefetch = 0 : i64, scratch_operands = 0 : i64, tpu.core_type = #tpu.core_type<tc>, window_params = [{transform_indices = @transform_0, window_bounds = array<i64: 1, 128, 128>}, {pipeline_mode = #tpu.pipeline_mode<synchronous>, transform_indices = @transform_1, window_bounds = array<i64: 128, 256>}, {pipeline_mode = #tpu.pipeline_mode<synchronous>, transform_indices = @transform_2, window_bounds = array<i64: 1, 128>}, {transform_indices = @transform_3, window_bounds = array<i64: 1, 128, 128>}, {transform_indices = @transform_4, window_bounds = array<i64: 1, 128, 128>}]} {
    %c0 = arith.constant 0 : index
    %c0_0 = arith.constant 0 : index
    %c0_1 = arith.constant 0 : index
    %0 = vector.load %arg1[%c0, %c0_0, %c0_1] : memref<1x128x128xf32, #tpu.memory_space<vmem>>, vector<1x128x128xf32>
    %1 = vector.shape_cast %0 : vector<1x128x128xf32> to vector<128x128xf32>
    %2 = arith.truncf %1 : vector<128x128xf32> to vector<128x128xbf16>
    %c0_2 = arith.constant 0 : index
    %c0_3 = arith.constant 0 : index
    %3 = vector.load %arg2[%c0_2, %c0_3] : memref<128x256xbf16, #tpu.memory_space<vmem>>, vector<128x256xbf16>
    %cst = arith.constant dense<0.000000e+00> : vector<128x256xf32>
    %4 = tpu.matmul %2, %3, %cst {dimension_numbers = #tpu.dot_dimension_numbers<[1], [0], [0], [1], [0, 0, 1, 1], [], []>} : vector<128x128xbf16>, vector<128x256xbf16>, vector<128x256xf32> -> vector<128x256xf32>
    %5 = vector.extract_strided_slice %4 {offsets = [0, 0], sizes = [128, 128], strides = [1, 1]} : vector<128x256xf32> to vector<128x128xf32>
    %c0_4 = arith.constant 0 : index
    %c0_5 = arith.constant 0 : index
    %6 = vector.load %arg3[%c0_4, %c0_5] : memref<1x128xf32, #tpu.memory_space<vmem>>, vector<1x128xf32>
    %7 = vector.shape_cast %6 : vector<1x128xf32> to vector<128xf32>
    %8 = vector.shape_cast %7 : vector<128xf32> to vector<1x128xf32>
    %9 = vector.broadcast %8 : vector<1x128xf32> to vector<128x128xf32>
    %10 = arith.addf %5, %9 : vector<128x128xf32>
    %11 = arith.truncf %10 : vector<128x128xf32> to vector<128x128xbf16>
    %c0_6 = arith.constant 0 : index
    %c0_7 = arith.constant 0 : index
    %c0_8 = arith.constant 0 : index
    %12 = vector.load %arg4[%c0_6, %c0_7, %c0_8] : memref<1x128x128xbf16, #tpu.memory_space<vmem>>, vector<1x128x128xbf16>
    %13 = vector.shape_cast %12 : vector<1x128x128xbf16> to vector<128x128xbf16>
    %14 = vector.shape_cast %11 : vector<128x128xbf16> to vector<1x128x128xbf16>
    tpu.vector_store %arg4[%c0_6, %c0_7, %c0_8], %14 {strides = array<i32>} : memref<1x128x128xbf16, #tpu.memory_space<vmem>>, vector<1x128x128xbf16>,
    %15 = vector.extract_strided_slice %4 {offsets = [0, 128], sizes = [128, 128], strides = [1, 1]} : vector<128x256xf32> to vector<128x128xf32>
    %16 = arith.truncf %15 : vector<128x128xf32> to vector<128x128xbf16>
    %c0_9 = arith.constant 0 : index
    %c0_10 = arith.constant 0 : index
    %c0_11 = arith.constant 0 : index
    %17 = vector.load %arg5[%c0_9, %c0_10, %c0_11] : memref<1x128x128xbf16, #tpu.memory_space<vmem>>, vector<1x128x128xbf16>
    %18 = vector.shape_cast %17 : vector<1x128x128xbf16> to vector<128x128xbf16>
    %19 = vector.shape_cast %16 : vector<128x128xbf16> to vector<1x128x128xbf16>
    tpu.vector_store %arg5[%c0_9, %c0_10, %c0_11], %19 {strides = array<i32>} : memref<1x128x128xbf16, #tpu.memory_space<vmem>>, vector<1x128x128xbf16>,
    return
  }
  func.func @transform_0(%arg0: i32) -> (i32, i32, i32) {
    %c0_i32 = arith.constant 0 : i32
    %c0_i32_0 = arith.constant 0 : i32
    %c0_i32_1 = arith.constant 0 : i32
    return %arg0, %c0_i32, %c0_i32_0 : i32, i32, i32
  }
  func.func @transform_1(%arg0: i32) -> (i32, i32) {
    %c0_i32 = arith.constant 0 : i32
    %c0_i32_0 = arith.constant 0 : i32
    %c0_i32_1 = arith.constant 0 : i32
    return %c0_i32, %c0_i32_0 : i32, i32
  }
  func.func @transform_2(%arg0: i32) -> (i32, i32) {
    %c0_i32 = arith.constant 0 : i32
    %c0_i32_0 = arith.constant 0 : i32
    %c0_i32_1 = arith.constant 0 : i32
    return %c0_i32, %c0_i32_0 : i32, i32
  }
  func.func @transform_3(%arg0: i32) -> (i32, i32, i32) {
    %c0_i32 = arith.constant 0 : i32
    %c0_i32_0 = arith.constant 0 : i32
    %c0_i32_1 = arith.constant 0 : i32
    return %arg0, %c0_i32, %c0_i32_0 : i32, i32, i32
  }
  func.func @transform_4(%arg0: i32) -> (i32, i32, i32) {
    %c0_i32 = arith.constant 0 : i32
    %c0_i32_0 = arith.constant 0 : i32
    %c0_i32_1 = arith.constant 0 : i32
    return %arg0, %c0_i32, %c0_i32_0 : i32, i32, i32
  }
}

</mosaic_0001>

<llo_original>
// kernel: tpu_custom_call.1
$region0: #{tpu_custom_call.1}
  #allocation0 [shape = 'u32[]', space=smem, size = 0x4, offset = 0x4, fixed_abs, tag = 'smem constant byte address 0x4 - core index']
  #allocation1 [shape = 'u32[144,128]{1,0:T(1,128)}', space=vmem, size = 0x12000, scoped, tag = 'internal scratch']
  %s0 = inlined_call_operand.hbm [shape: f32[2,128,128], index: 0, kind: input, shape index: {}]
  %s1 = inlined_call_operand.hbm [shape: bf16[128,256], index: 1, kind: input, shape index: {}]
  %s2 = inlined_call_operand.vmem [shape: f32[1,128], index: 2, kind: input, shape index: {}]
  %s3 = inlined_call_operand.hbm [shape: bf16[2,128,128], index: 3, kind: output, shape index: {0}]
  %s4 = inlined_call_operand.hbm [shape: bf16[2,128,128], index: 4, kind: output, shape index: {1}]
  %5 = xla_tuple %s3, %s4
  %s6 = sld [smem:[#allocation0]]
  $region61: #{tpu_custom_call.1} parent=0
    _
  %s8 = ssub.s32 1, %s6
  %s9 = scalar_select 0, %s8, %s6
  $region1: #{tpu_custom_call.1} parent=0
    #allocation2 [shape = 'u8[131072]{0}', space=vmem, size = 0x20000, scoped, tag = 'input window, operand 0']
    #allocation3 [shape = 's32[2]{0}', space=sflag, size = 0x8, scoped, tag = 'scoped memory for tpu_custom_call.1']
    #allocation4 [shape = 's32[2]{0}', space=sflag, size = 0x8, scoped, tag = 'scoped memory for tpu_custom_call.1']
    #allocation5 [shape = 'u8[65536]{0}', space=vmem, size = 0x10000, scoped, tag = 'input window, operand 1, single buffered']
    #allocation6 [shape = 's32[1]{0}', space=sflag, size = 0x4, scoped, tag = 'scoped memory for tpu_custom_call.1']
    #allocation7 [shape = 'u8[65536]{0}', space=vmem, size = 0x10000, scoped, tag = 'output window, operand 0']
    #allocation8 [shape = 'u8[65536]{0}', space=vmem, size = 0x10000, scoped, tag = 'output window, operand 1']
    #allocation9 [shape = 's32[2]{0}', space=sflag, size = 0x8, scoped, tag = 'scoped memory for tpu_custom_call.1']
    %10 = vsyncpa [#allocation3], 0
    %s11 = scalar_lea.sflag [#allocation3], 1
    %12 = vsyncpa %s11, 0
    %13 = vsyncpa [#allocation6], 0
    %14 = vsyncpa [#allocation4], 0
    %s15 = scalar_lea.sflag [#allocation4], 1
    %16 = vsyncpa %s15, 0
    %17 = vsyncpa [#allocation9], 0
    %s18 = scalar_lea.sflag [#allocation9], 1
    %19 = vsyncpa %s18, 0
    loop: start=0, step=1, limit=4
    $region2: #{tpu_custom_call.1} parent=1 // loop_pre_header
      _
    $region3: #{tpu_custom_call.1} parent=1 // loop_header
      %s21 = sphi 0, %s25
      %p22 = scmp.ge.s32.totalorder %s21, 4
      %s31 = sphi 0, %s33
      %s34 = sphi 0, %s31
      %s35 = sphi 0, %s34
      %s51 = sphi 0, %s35
      %s55 = sphi 0, %s55
      %s57 = sphi 0, %s55
      %s58 = sphi 0, %s57
      %s72 = sphi 0, %s58
      %s76 = sphi 0, %s76
      %s78 = sphi 0, %s76
      %s79 = sphi 0, %s78
      %s93 = sphi 0, %s79
      %s99 = sphi 0, %s101
      %s102 = sphi 0, %s99
      %s103 = sphi 0, %s102
      %s119 = sphi 0, %s103
      %s125 = sphi 0, %s127
      %s128 = sphi 0, %s125
      %s129 = sphi 0, %s128
      %s145 = sphi 0, %s129
    $region4: #{tpu_custom_call.1} parent=1 // loop_header_branch
      %24 = sbr.rel (%p22) target = $region8
    $region5: #{tpu_custom_call.1} parent=1 // loop_body
      %s26 = ssub.s32 %s21, 1
      %s27 = ssub.s32 %s21, 2
      %s28 = sadd.s32 %s21, 1
      %s29 = ssub.s32 %s21, %s28
      %p30 = scmp.eq.s32.totalorder %s29, 0
      %s32 = sadd.s32 %s31, 1
      %s33 = scalar_select %p30, %s31, %s32
      %p36 = pneg %p30
      %p37 = scmp.eq.s32.totalorder %s21, 1
      %p38 = por %p36, %p37
      %p39 = scmp.ne.s32.totalorder %s31, %s34
      %p40 = scmp.eq.s32.totalorder %s21, 0
      %p41 = por %p39, %p40
      %p42 = scmp.ne.s32.totalorder %s31, %s34
      %p43 = scmp.eq.s32.totalorder %s26, 1
      %p44 = por %p42, %p43
      %p45 = scmp.ne.s32.totalorder %s34, %s35
      %p46 = scmp.eq.s32.totalorder %s26, 0
      %p47 = por %p45, %p46
      %p48 = scmp.ne.s32.totalorder %s34, %s35
      %p49 = scmp.eq.s32.totalorder %s27, 1
      %p50 = por %p48, %p49
      %p52 = scmp.ne.s32.totalorder %s35, %s51
      %p53 = scmp.eq.s32.totalorder %s27, 0
      %p54 = por %p52, %p53
      %s56 = sadd.s32 %s55, 1
      %p59 = scmp.eq.s32.totalorder %s21, 1
      %p60 = scmp.ne.s32.totalorder %s55, %s57
      %p61 = scmp.eq.s32.totalorder %s21, 0
      %p62 = por %p60, %p61
      %p63 = scmp.ne.s32.totalorder %s55, %s57
      %p64 = scmp.eq.s32.totalorder %s26, 1
      %p65 = por %p63, %p64
      %p66 = scmp.ne.s32.totalorder %s57, %s58
      %p67 = scmp.eq.s32.totalorder %s26, 0
      %p68 = por %p66, %p67
      %p69 = scmp.ne.s32.totalorder %s57, %s58
      %p70 = scmp.eq.s32.totalorder %s27, 1
      %p71 = por %p69, %p70
      %p73 = scmp.ne.s32.totalorder %s58, %s72
      %p74 = scmp.eq.s32.totalorder %s27, 0
      %p75 = por %p73, %p74
      %s77 = sadd.s32 %s76, 1
      %p80 = scmp.eq.s32.totalorder %s21, 1
      %p81 = scmp.ne.s32.totalorder %s76, %s78
      %p82 = scmp.eq.s32.totalorder %s21, 0
      %p83 = por %p81, %p82
      %p84 = scmp.ne.s32.totalorder %s76, %s78
      %p85 = scmp.eq.s32.totalorder %s26, 1
      %p86 = por %p84, %p85
      %p87 = scmp.ne.s32.totalorder %s78, %s79
      %p88 = scmp.eq.s32.totalorder %s26, 0
      %p89 = por %p87, %p88
      %p90 = scmp.ne.s32.totalorder %s78, %s79
      %p91 = scmp.eq.s32.totalorder %s27, 1
      %p92 = por %p90, %p91
      %p94 = scmp.ne.s32.totalorder %s79, %s93
      %p95 = scmp.eq.s32.totalorder %s27, 0
      %p96 = por %p94, %p95
      %s97 = ssub.s32 %s21, %s28
      %p98 = scmp.eq.s32.totalorder %s97, 0
      %s100 = sadd.s32 %s99, 1
      %s101 = scalar_select %p98, %s99, %s100
      %p104 = pneg %p98
      %p105 = scmp.eq.s32.totalorder %s21, 1
      %p106 = por %p104, %p105
      %p107 = scmp.ne.s32.totalorder %s99, %s102
      %p108 = scmp.eq.s32.totalorder %s21, 0
      %p109 = por %p107, %p108
      %p110 = scmp.ne.s32.totalorder %s99, %s102
      %p111 = scmp.eq.s32.totalorder %s26, 1
      %p112 = por %p110, %p111
      %p113 = scmp.ne.s32.totalorder %s102, %s103
      %p114 = scmp.eq.s32.totalorder %s26, 0
      %p115 = por %p113, %p114
      %p116 = scmp.ne.s32.totalorder %s102, %s103
      %p117 = scmp.eq.s32.totalorder %s27, 1
      %p118 = por %p116, %p117
      %p120 = scmp.ne.s32.totalorder %s103, %s119
      %p121 = scmp.eq.s32.totalorder %s27, 0
      %p122 = por %p120, %p121
      %s123 = ssub.s32 %s21, %s28
      %p124 = scmp.eq.s32.totalorder %s123, 0
      %s126 = sadd.s32 %s125, 1
      %s127 = scalar_select %p124, %s125, %s126
      %p130 = pneg %p124
      %p131 = scmp.eq.s32.totalorder %s21, 1
      %p132 = por %p130, %p131
      %p133 = scmp.ne.s32.totalorder %s125, %s128
      %p134 = scmp.eq.s32.totalorder %s21, 0
      %p135 = por %p133, %p134
      %p136 = scmp.ne.s32.totalorder %s125, %s128
      %p137 = scmp.eq.s32.totalorder %s26, 1
      %p138 = por %p136, %p137
      %p139 = scmp.ne.s32.totalorder %s128, %s129
      %p140 = scmp.eq.s32.totalorder %s26, 0
      %p141 = por %p139, %p140
      %p142 = scmp.ne.s32.totalorder %s128, %s129
      %p143 = scmp.eq.s32.totalorder %s27, 1
      %p144 = por %p142, %p143
      %p146 = scmp.ne.s32.totalorder %s129, %s145
      %p147 = scmp.eq.s32.totalorder %s27, 0
      %p148 = por %p146, %p147
      %p149 = scmp.le.s32.totalorder 1, %s21
      %p150 = scmp.lt.s32.totalorder %s21, 3
      %p151 = pnand %p149, %p150
      %p152 = pneg %p151
      // Predicated region
      $region9: #{tpu_custom_call.1} parent=5 // pred_check
        _
      $region10: #{tpu_custom_call.1} parent=5 // pred_check_branch
        %154 = sbr.rel (%p151) target = $region12
      $region11: #{tpu_custom_call.1} parent=5 // pred_region
        %s155 = ssub.s32 %s21, 1
        // Predicated region
        $region13: #{tpu_custom_call.1} parent=11 // pred_check
          %p156 = pneg %p68
        $region14: #{tpu_custom_call.1} parent=11 // pred_check_branch
          %158 = sbr.rel (%p156) target = $region16
        $region15: #{tpu_custom_call.1} parent=11 // pred_region
          %s160 = ssub.s32 2048, 2048
          %161 = vsyncadd [#allocation6], %s160
          %s162 = sshll.u32 [#allocation5], 4
          %s163 = int_to_ptr.vmem [resolvable:$true] %s162
          %168 = dma.hbm_to_vmem [thread:$0]  %s1, 2048, %s163, [#allocation6], 128, 128, 8
        $region16: #{tpu_custom_call.1} parent=11 // pred_fallthru
          _
        // Predicated region
        $region17: #{tpu_custom_call.1} parent=11 // pred_check
          %p169 = pneg %p89
        $region18: #{tpu_custom_call.1} parent=11 // pred_check_branch
          %171 = sbr.rel (%p169) target = $region20
        $region19: #{tpu_custom_call.1} parent=11 // pred_region
          _
        $region20: #{tpu_custom_call.1} parent=11 // pred_fallthru
          _
      $region12: #{tpu_custom_call.1} parent=5 // pred_fallthru
        _
      %p172 = scmp.lt.s32.totalorder %s21, 2
      // Predicated region
      $region21: #{tpu_custom_call.1} parent=5 // pred_check
        %p173 = pneg %p172
      $region22: #{tpu_custom_call.1} parent=5 // pred_check_branch
        %175 = sbr.rel (%p173) target = $region24
      $region23: #{tpu_custom_call.1} parent=5 // pred_region
        // Predicated region
        $region25: #{tpu_custom_call.1} parent=23 // pred_check
          %p176 = pneg %p41
        $region26: #{tpu_custom_call.1} parent=23 // pred_check_branch
          %178 = sbr.rel (%p176) target = $region28
        $region27: #{tpu_custom_call.1} parent=23 // pred_region
          %s179 = sand.u32 %s31, 1
          %s180 = scalar_lea.sflag [#allocation3], %s179
          %s181 = sand.u32 %s31, 1
          %s182 = smul.addr %s181, 128
          %s183 = scalar_lea.vmem [#allocation2], %s182
          %s185 = ssub.s32 2048, 2048
          %186 = vsyncadd %s180, %s185
          %s187 = smul.addr %s21, 16
          %s188 = smul.addr %s187, 128
          %s189 = scalar_lea.hbm %s0, %s188
          %s190 = sshll.u32 %s183, 4
          %s191 = int_to_ptr.vmem [resolvable:$true] %s190
          %196 = dma.hbm_to_vmem [thread:$0]  %s189, 2048, %s191, %s180, 128, 128, 8
        $region28: #{tpu_custom_call.1} parent=23 // pred_fallthru
          _
      $region24: #{tpu_custom_call.1} parent=5 // pred_fallthru
        _
      %p197 = scmp.le.s32.totalorder 1, %s21
      %p198 = scmp.lt.s32.totalorder %s21, 3
      %p199 = pnand %p197, %p198
      %p200 = pneg %p199
      // Predicated region
      $region29: #{tpu_custom_call.1} parent=5 // pred_check
        _
      $region30: #{tpu_custom_call.1} parent=5 // pred_check_branch
        %202 = sbr.rel (%p199) target = $region32
      $region31: #{tpu_custom_call.1} parent=5 // pred_region
        %s203 = ssub.s32 %s21, 1
        %s204 = sand.u32 %s34, 1
        %s205 = scalar_lea.sflag [#allocation3], %s204
        %s206 = sand.u32 %s34, 1
        %s207 = smul.addr %s206, 128
        %s208 = scalar_lea.vmem [#allocation2], %s207
        // Predicated region
        $region33: #{tpu_custom_call.1} parent=31 // pred_check
          %p209 = pneg %p47
        $region34: #{tpu_custom_call.1} parent=31 // pred_check_branch
          %211 = sbr.rel (%p209) target = $region36
        $region35: #{tpu_custom_call.1} parent=31 // pred_region
          %212 = dma.done %s205, 2048
        $region36: #{tpu_custom_call.1} parent=31 // pred_fallthru
          _
        // Predicated region
        $region37: #{tpu_custom_call.1} parent=31 // pred_check
          %p213 = pneg %p68
        $region38: #{tpu_custom_call.1} parent=31 // pred_check_branch
          %215 = sbr.rel (%p213) target = $region40
        $region39: #{tpu_custom_call.1} parent=31 // pred_region
          %216 = dma.done [#allocation6], 2048
        $region40: #{tpu_custom_call.1} parent=31 // pred_fallthru
          _
        %s217 = sand.u32 %s34, 1
        %s218 = scalar_lea.sflag [#allocation3], %s217
        %s219 = sand.u32 %s34, 1
        %s220 = smul.addr %s219, 128
        %s221 = scalar_lea.vmem [#allocation2], %s220
        %p222 = pneg %p47
        %p223 = pneg %p44
        %p224 = pneg %p68
        %p225 = pneg %p65
        %p226 = pneg %p89
        %p227 = pneg %p86
        %p228 = pneg %p115
        %p229 = pneg %p112
        %s230 = sand.u32 %s102, 1
        %s231 = scalar_lea.sflag [#allocation4], %s230
        %s232 = sand.u32 %s102, 1
        %s233 = smul.addr %s232, 64
        %s234 = scalar_lea.vmem [#allocation7], %s233
        %p235 = pneg %p141
        %p236 = pneg %p138
        %s237 = sand.u32 %s128, 1
        %s238 = scalar_lea.sflag [#allocation9], %s237
        %s239 = sand.u32 %s128, 1
        %s240 = smul.addr %s239, 64
        %s241 = scalar_lea.vmem [#allocation8], %s240
        %v243 = vld [vmem:[%s208] sm:$0xff]
        %v244 = vld [vmem:[%s208 + $0x8] sm:$0xff]
        %v245 = vld [vmem:[%s208 + $0x10] sm:$0xff]
        %v246 = vld [vmem:[%s208 + $0x18] sm:$0xff]
        %v247 = vld [vmem:[%s208 + $0x20] sm:$0xff]
        %v248 = vld [vmem:[%s208 + $0x28] sm:$0xff]
        %v249 = vld [vmem:[%s208 + $0x30] sm:$0xff]
        %v250 = vld [vmem:[%s208 + $0x38] sm:$0xff]
        %v251 = vld [vmem:[%s208 + $0x40] sm:$0xff]
        %v252 = vld [vmem:[%s208 + $0x48] sm:$0xff]
        %v253 = vld [vmem:[%s208 + $0x50] sm:$0xff]
        %v254 = vld [vmem:[%s208 + $0x58] sm:$0xff]
        %v255 = vld [vmem:[%s208 + $0x60] sm:$0xff]
        %v256 = vld [vmem:[%s208 + $0x68] sm:$0xff]
        %v257 = vld [vmem:[%s208 + $0x70] sm:$0xff]
        %v258 = vld [vmem:[%s208 + $0x78] sm:$0xff]
        %v259 = vpack.c.bf16 %v244, %v243
        %v260 = vpack.c.bf16 %v246, %v245
        %v261 = vpack.c.bf16 %v248, %v247
        %v262 = vpack.c.bf16 %v250, %v249
        %v263 = vpack.c.bf16 %v252, %v251
        %v264 = vpack.c.bf16 %v254, %v253
        %v265 = vpack.c.bf16 %v256, %v255
        %v266 = vpack.c.bf16 %v258, %v257
        %v267 = vld [vmem:[#allocation5] sm:$0xff]
        %v268 = vld [vmem:[#allocation5 + $0x8] sm:$0xff]
        %v269 = vld [vmem:[#allocation5 + $0x10] sm:$0xff]
        %v270 = vld [vmem:[#allocation5 + $0x18] sm:$0xff]
        %v271 = vld [vmem:[#allocation5 + $0x20] sm:$0xff]
        %v272 = vld [vmem:[#allocation5 + $0x28] sm:$0xff]
        %v273 = vld [vmem:[#allocation5 + $0x30] sm:$0xff]
        %v274 = vld [vmem:[#allocation5 + $0x38] sm:$0xff]
        %v275 = vld [vmem:[#allocation5 + $0x40] sm:$0xff]
        %v276 = vld [vmem:[#allocation5 + $0x48] sm:$0xff]
        %v277 = vld [vmem:[#allocation5 + $0x50] sm:$0xff]
        %v278 = vld [vmem:[#allocation5 + $0x58] sm:$0xff]
        %v279 = vld [vmem:[#allocation5 + $0x60] sm:$0xff]
        %v280 = vld [vmem:[#allocation5 + $0x68] sm:$0xff]
        %v281 = vld [vmem:[#allocation5 + $0x70] sm:$0xff]
        %v282 = vld [vmem:[#allocation5 + $0x78] sm:$0xff]
        %v299 = vunpack.c.l.b16 %v267
        %v300 = vunpack.c.h.b16 %v267
        %v301 = vunpack.c.l.b16 %v268
        %v302 = vunpack.c.h.b16 %v268
        %v303 = vunpack.c.l.b16 %v269
        %v304 = vunpack.c.h.b16 %v269
        %v305 = vunpack.c.l.b16 %v270
        %v306 = vunpack.c.h.b16 %v270
        %v307 = vunpack.c.l.b16 %v271
        %v308 = vunpack.c.h.b16 %v271
        %v309 = vunpack.c.l.b16 %v272
        %v310 = vunpack.c.h.b16 %v272
        %v311 = vunpack.c.l.b16 %v273
        %v312 = vunpack.c.h.b16 %v273
        %v313 = vunpack.c.l.b16 %v274
        %v314 = vunpack.c.h.b16 %v274
        %v315 = vunpack.c.l.b16 %v275
        %v316 = vunpack.c.h.b16 %v275
        %v317 = vunpack.c.l.b16 %v276
        %v318 = vunpack.c.h.b16 %v276
        %v319 = vunpack.c.l.b16 %v277
        %v320 = vunpack.c.h.b16 %v277
        %v321 = vunpack.c.l.b16 %v278
        %v322 = vunpack.c.h.b16 %v278
        %v323 = vunpack.c.l.b16 %v279
        %v324 = vunpack.c.h.b16 %v279
        %v325 = vunpack.c.l.b16 %v280
        %v326 = vunpack.c.h.b16 %v280
        %v327 = vunpack.c.l.b16 %v281
        %v328 = vunpack.c.h.b16 %v281
        %v329 = vunpack.c.l.b16 %v282
        %v330 = vunpack.c.h.b16 %v282
        %v331 = vpack.c.b16 %v301, %v299
        %v332 = vpack.c.b16 %v302, %v300
        %v333 = vpack.c.b16 %v305, %v303
        %v334 = vpack.c.b16 %v306, %v304
        %v335 = vpack.c.b16 %v309, %v307
        %v336 = vpack.c.b16 %v310, %v308
        %v337 = vpack.c.b16 %v313, %v311
        %v338 = vpack.c.b16 %v314, %v312
        %v339 = vpack.c.b16 %v317, %v315
        %v340 = vpack.c.b16 %v318, %v316
        %v341 = vpack.c.b16 %v321, %v319
        %v342 = vpack.c.b16 %v322, %v320
        %v343 = vpack.c.b16 %v325, %v323
        %v344 = vpack.c.b16 %v326, %v324
        %v345 = vpack.c.b16 %v329, %v327
        %v346 = vpack.c.b16 %v330, %v328
        %363 = vmatprep.subr.bf16.mxu0 %v346
        %364 = vmatpush1.bf16.msra.mxu0 %v345
        %365 = vmatprep.subr.bf16.mxu0 %v344
        %366 = vmatpush1.bf16.msra.mxu0 %v343
        %367 = vmatprep.subr.bf16.mxu0 %v342
        %368 = vmatpush1.bf16.msra.mxu0 %v341
        %369 = vmatprep.subr.bf16.mxu0 %v340
        %370 = vmatpush1.bf16.msra.mxu0 %v339
        %371 = vmatprep.subr.bf16.mxu0 %v338
        %372 = vmatpush1.bf16.msra.mxu0 %v337
        %373 = vmatprep.subr.bf16.mxu0 %v336
        %374 = vmatpush1.bf16.msra.mxu0 %v335
        %375 = vmatprep.subr.bf16.mxu0 %v334
        %376 = vmatpush1.bf16.msra.mxu0 %v333
        %377 = vmatprep.subr.bf16.mxu0 %v332
        %378 = vmatpush1.bf16.msra.mxu0 %v331
        %379 = vmatprep.subr.bf16.mxu0 0
        %380 = vmatpush2.bf16.msra.mxu0 0
        %381 = vmatprep.subr.bf16.mxu0 0
        %382 = vmatpush2.bf16.msra.mxu0 0
        %383 = vmatprep.subr.bf16.mxu0 0
        %384 = vmatpush2.bf16.msra.mxu0 0
        %385 = vmatprep.subr.bf16.mxu0 0
        %386 = vmatpush2.bf16.msra.mxu0 0
        %387 = vmatprep.subr.bf16.mxu0 0
        %388 = vmatpush2.bf16.msra.mxu0 0
        %389 = vmatprep.subr.bf16.mxu0 0
        %390 = vmatpush2.bf16.msra.mxu0 0
        %391 = vmatprep.subr.bf16.mxu0 0
        %392 = vmatpush2.bf16.msra.mxu0 0
        %393 = vmatprep.subr.bf16.mxu0 0
        %394 = vmatpush2.bf16.msra.mxu0 0
        %395 = vmatprep.mubr.bf16.mxu0 0
        %396 = vmatmul.mubr.bf16.gmra.mxu0 %v259
        %v397 = vpop.f32.mrf.mxu0
        %v398 = vadd.f32 0.0, %v397
        %v399 = vpop.f32.mrf.mxu0
        %v400 = vadd.f32 0.0, %v399
        %v401 = vpop.f32.mrf.mxu0
        %v402 = vadd.f32 0.0, %v401
        %v403 = vpop.f32.mrf.mxu0
        %v404 = vadd.f32 0.0, %v403
        %405 = vmatprep.mubr.bf16.mxu0 0
        %406 = vmatmul.mubr.bf16.gmra.mxu0 %v260
        %v407 = vpop.f32.mrf.mxu0
        %v408 = vadd.f32 0.0, %v407
        %v409 = vpop.f32.mrf.mxu0
        %v410 = vadd.f32 0.0, %v409
        %v411 = vpop.f32.mrf.mxu0
        %v412 = vadd.f32 0.0, %v411
        %v413 = vpop.f32.mrf.mxu0
        %v414 = vadd.f32 0.0, %v413
        %415 = vmatprep.mubr.bf16.mxu0 0
        %416 = vmatmul.mubr.bf16.gmra.mxu0 %v261
        %v417 = vpop.f32.mrf.mxu0
        %v418 = vadd.f32 0.0, %v417
        %v419 = vpop.f32.mrf.mxu0
        %v420 = vadd.f32 0.0, %v419
        %v421 = vpop.f32.mrf.mxu0
        %v422 = vadd.f32 0.0, %v421
        %v423 = vpop.f32.mrf.mxu0
        %v424 = vadd.f32 0.0, %v423
        %425 = vmatprep.mubr.bf16.mxu0 0
        %426 = vmatmul.mubr.bf16.gmra.mxu0 %v262
        %v427 = vpop.f32.mrf.mxu0
        %v428 = vadd.f32 0.0, %v427
        %v429 = vpop.f32.mrf.mxu0
        %v430 = vadd.f32 0.0, %v429
        %v431 = vpop.f32.mrf.mxu0
        %v432 = vadd.f32 0.0, %v431
        %v433 = vpop.f32.mrf.mxu0
        %v434 = vadd.f32 0.0, %v433
        %435 = vmatprep.mubr.bf16.mxu0 0
        %436 = vmatmul.mubr.bf16.gmra.mxu0 %v263
        %v437 = vpop.f32.mrf.mxu0
        %v438 = vadd.f32 0.0, %v437
        %v439 = vpop.f32.mrf.mxu0
        %v440 = vadd.f32 0.0, %v439
        %v441 = vpop.f32.mrf.mxu0
        %v442 = vadd.f32 0.0, %v441
        %v443 = vpop.f32.mrf.mxu0
        %v444 = vadd.f32 0.0, %v443
        %445 = vmatprep.mubr.bf16.mxu0 0
        %446 = vmatmul.mubr.bf16.gmra.mxu0 %v264
        %v447 = vpop.f32.mrf.mxu0
        %v448 = vadd.f32 0.0, %v447
        %v449 = vpop.f32.mrf.mxu0
        %v450 = vadd.f32 0.0, %v449
        %v451 = vpop.f32.mrf.mxu0
        %v452 = vadd.f32 0.0, %v451
        %v453 = vpop.f32.mrf.mxu0
        %v454 = vadd.f32 0.0, %v453
        %455 = vmatprep.mubr.bf16.mxu0 0
        %456 = vmatmul.mubr.bf16.gmra.mxu0 %v265
        %v457 = vpop.f32.mrf.mxu0
        %v458 = vadd.f32 0.0, %v457
        %v459 = vpop.f32.mrf.mxu0
        %v460 = vadd.f32 0.0, %v459
        %v461 = vpop.f32.mrf.mxu0
        %v462 = vadd.f32 0.0, %v461
        %v463 = vpop.f32.mrf.mxu0
        %v464 = vadd.f32 0.0, %v463
        %465 = vmatprep.mubr.bf16.mxu0 0
        %466 = vmatmul.mubr.bf16.gmra.mxu0 %v266
        %v467 = vpop.f32.mrf.mxu0
        %v468 = vadd.f32 0.0, %v467
        %v469 = vpop.f32.mrf.mxu0
        %v470 = vadd.f32 0.0, %v469
        %v471 = vpop.f32.mrf.mxu0
        %v472 = vadd.f32 0.0, %v471
        %v473 = vpop.f32.mrf.mxu0
        %v474 = vadd.f32 0.0, %v473
        %475 = vdwg.mxu0
        %v476 = vld [vmem:[%s2] sm:$0x1]
        %v478 = vlaneseq
        %v479 = vshrl.u32 %v478, 7
        %v480 = vsub.s32 0, %v479
        %v481 = vrot.slane %v476, %v480
        %v483 = vadd.f32 %v398, %v481
        %v484 = vadd.f32 %v402, %v481
        %v485 = vadd.f32 %v408, %v481
        %v486 = vadd.f32 %v412, %v481
        %v487 = vadd.f32 %v418, %v481
        %v488 = vadd.f32 %v422, %v481
        %v489 = vadd.f32 %v428, %v481
        %v490 = vadd.f32 %v432, %v481
        %v491 = vadd.f32 %v438, %v481
        %v492 = vadd.f32 %v442, %v481
        %v493 = vadd.f32 %v448, %v481
        %v494 = vadd.f32 %v452, %v481
        %v495 = vadd.f32 %v458, %v481
        %v496 = vadd.f32 %v462, %v481
        %v497 = vadd.f32 %v468, %v481
        %v498 = vadd.f32 %v472, %v481
        %v499 = vpack.c.bf16 %v484, %v483
        %v500 = vpack.c.bf16 %v486, %v485
        %v501 = vpack.c.bf16 %v488, %v487
        %v502 = vpack.c.bf16 %v490, %v489
        %v503 = vpack.c.bf16 %v492, %v491
        %v504 = vpack.c.bf16 %v494, %v493
        %v505 = vpack.c.bf16 %v496, %v495
        %v506 = vpack.c.bf16 %v498, %v497
        %v515 = vunpack.c.l.b16 %v499
        %v516 = vunpack.c.h.b16 %v499
        %v517 = vunpack.c.l.b16 %v500
        %v518 = vunpack.c.h.b16 %v500
        %v519 = vunpack.c.l.b16 %v501
        %v520 = vunpack.c.h.b16 %v501
        %v521 = vunpack.c.l.b16 %v502
        %v522 = vunpack.c.h.b16 %v502
        %v523 = vunpack.c.l.b16 %v503
        %v524 = vunpack.c.h.b16 %v503
        %v525 = vunpack.c.l.b16 %v504
        %v526 = vunpack.c.h.b16 %v504
        %v527 = vunpack.c.l.b16 %v505
        %v528 = vunpack.c.h.b16 %v505
        %v529 = vunpack.c.l.b16 %v506
        %v530 = vunpack.c.h.b16 %v506
        %v531 = vpack.c.b16 %v515, %v515
        %v532 = vpack.c.b16 %v516, %v516
        %v533 = vpack.c.b16 %v517, %v517
        %v534 = vpack.c.b16 %v518, %v518
        %v535 = vpack.c.b16 %v519, %v519
        %v536 = vpack.c.b16 %v520, %v520
        %v537 = vpack.c.b16 %v521, %v521
        %v538 = vpack.c.b16 %v522, %v522
        %v539 = vpack.c.b16 %v523, %v523
        %v540 = vpack.c.b16 %v524, %v524
        %v541 = vpack.c.b16 %v525, %v525
        %v542 = vpack.c.b16 %v526, %v526
        %v543 = vpack.c.b16 %v527, %v527
        %v544 = vpack.c.b16 %v528, %v528
        %v545 = vpack.c.b16 %v529, %v529
        %v546 = vpack.c.b16 %v530, %v530
        %563 = vst [vmem:[%s234] sm:$0xf] %v531
        %564 = vst [vmem:[%s234 + $0x4] sm:$0xf] %v532
        %565 = vst [vmem:[%s234 + $0x8] sm:$0xf] %v533
        %566 = vst [vmem:[%s234 + $0xc] sm:$0xf] %v534
        %567 = vst [vmem:[%s234 + $0x10] sm:$0xf] %v535
        %568 = vst [vmem:[%s234 + $0x14] sm:$0xf] %v536
        %569 = vst [vmem:[%s234 + $0x18] sm:$0xf] %v537
        %570 = vst [vmem:[%s234 + $0x1c] sm:$0xf] %v538
        %571 = vst [vmem:[%s234 + $0x20] sm:$0xf] %v539
        %572 = vst [vmem:[%s234 + $0x24] sm:$0xf] %v540
        %573 = vst [vmem:[%s234 + $0x28] sm:$0xf] %v541
        %574 = vst [vmem:[%s234 + $0x2c] sm:$0xf] %v542
        %575 = vst [vmem:[%s234 + $0x30] sm:$0xf] %v543
        %576 = vst [vmem:[%s234 + $0x34] sm:$0xf] %v544
        %577 = vst [vmem:[%s234 + $0x38] sm:$0xf] %v545
        %578 = vst [vmem:[%s234 + $0x3c] sm:$0xf] %v546
        %v579 = vpack.c.bf16 %v404, %v400
        %v580 = vpack.c.bf16 %v414, %v410
        %v581 = vpack.c.bf16 %v424, %v420
        %v582 = vpack.c.bf16 %v434, %v430
        %v583 = vpack.c.bf16 %v444, %v440
        %v584 = vpack.c.bf16 %v454, %v450
        %v585 = vpack.c.bf16 %v464, %v460
        %v586 = vpack.c.bf16 %v474, %v470
        %v595 = vunpack.c.l.b16 %v579
        %v596 = vunpack.c.h.b16 %v579
        %v597 = vunpack.c.l.b16 %v580
        %v598 = vunpack.c.h.b16 %v580
        %v599 = vunpack.c.l.b16 %v581
        %v600 = vunpack.c.h.b16 %v581
        %v601 = vunpack.c.l.b16 %v582
        %v602 = vunpack.c.h.b16 %v582
        %v603 = vunpack.c.l.b16 %v583
        %v604 = vunpack.c.h.b16 %v583
        %v605 = vunpack.c.l.b16 %v584
        %v606 = vunpack.c.h.b16 %v584
        %v607 = vunpack.c.l.b16 %v585
        %v608 = vunpack.c.h.b16 %v585
        %v609 = vunpack.c.l.b16 %v586
        %v610 = vunpack.c.h.b16 %v586
        %v611 = vpack.c.b16 %v595, %v595
        %v612 = vpack.c.b16 %v596, %v596
        %v613 = vpack.c.b16 %v597, %v597
        %v614 = vpack.c.b16 %v598, %v598
        %v615 = vpack.c.b16 %v599, %v599
        %v616 = vpack.c.b16 %v600, %v600
        %v617 = vpack.c.b16 %v601, %v601
        %v618 = vpack.c.b16 %v602, %v602
        %v619 = vpack.c.b16 %v603, %v603
        %v620 = vpack.c.b16 %v604, %v604
        %v621 = vpack.c.b16 %v605, %v605
        %v622 = vpack.c.b16 %v606, %v606
        %v623 = vpack.c.b16 %v607, %v607
        %v624 = vpack.c.b16 %v608, %v608
        %v625 = vpack.c.b16 %v609, %v609
        %v626 = vpack.c.b16 %v610, %v610
        %643 = vst [vmem:[%s241] sm:$0xf] %v611
        %644 = vst [vmem:[%s241 + $0x4] sm:$0xf] %v612
        %645 = vst [vmem:[%s241 + $0x8] sm:$0xf] %v613
        %646 = vst [vmem:[%s241 + $0xc] sm:$0xf] %v614
        %647 = vst [vmem:[%s241 + $0x10] sm:$0xf] %v615
        %648 = vst [vmem:[%s241 + $0x14] sm:$0xf] %v616
        %649 = vst [vmem:[%s241 + $0x18] sm:$0xf] %v617
        %650 = vst [vmem:[%s241 + $0x1c] sm:$0xf] %v618
        %651 = vst [vmem:[%s241 + $0x20] sm:$0xf] %v619
        %652 = vst [vmem:[%s241 + $0x24] sm:$0xf] %v620
        %653 = vst [vmem:[%s241 + $0x28] sm:$0xf] %v621
        %654 = vst [vmem:[%s241 + $0x2c] sm:$0xf] %v622
        %655 = vst [vmem:[%s241 + $0x30] sm:$0xf] %v623
        %656 = vst [vmem:[%s241 + $0x34] sm:$0xf] %v624
        %657 = vst [vmem:[%s241 + $0x38] sm:$0xf] %v625
        %658 = vst [vmem:[%s241 + $0x3c] sm:$0xf] %v626
        %s659 = sand.u32 %s102, 1
        %s660 = scalar_lea.sflag [#allocation4], %s659
        %s661 = sand.u32 %s102, 1
        %s662 = smul.addr %s661, 64
        %s663 = scalar_lea.vmem [#allocation7], %s662
        %s664 = sand.u32 %s128, 1
        %s665 = scalar_lea.sflag [#allocation9], %s664
        %s666 = sand.u32 %s128, 1
        %s667 = smul.addr %s666, 64
        %s668 = scalar_lea.vmem [#allocation8], %s667
        // Predicated region
        $region41: #{tpu_custom_call.1} parent=31 // pred_check
          %p669 = pneg %p112
        $region42: #{tpu_custom_call.1} parent=31 // pred_check_branch
          %671 = sbr.rel (%p669) target = $region44
        $region43: #{tpu_custom_call.1} parent=31 // pred_region
          %s673 = ssub.s32 1024, 1024
          %674 = vsyncadd %s660, %s673
          %s675 = smul.addr %s26, 16
          %s676 = smul.addr %s675, 64
          %s677 = scalar_lea.hbm %s3, %s676
          %s678 = sshll.u32 %s663, 4
          %s679 = int_to_ptr.vmem [resolvable:$true] %s678
          %684 = dma.vmem_to_hbm [thread:$0]  %s679, 1024, %s677, %s660, 64, 64, 4
        $region44: #{tpu_custom_call.1} parent=31 // pred_fallthru
          _
        // Predicated region
        $region45: #{tpu_custom_call.1} parent=31 // pred_check
          %p685 = pneg %p138
        $region46: #{tpu_custom_call.1} parent=31 // pred_check_branch
          %687 = sbr.rel (%p685) target = $region48
        $region47: #{tpu_custom_call.1} parent=31 // pred_region
          %s689 = ssub.s32 1024, 1024
          %690 = vsyncadd %s665, %s689
          %s691 = smul.addr %s26, 16
          %s692 = smul.addr %s691, 64
          %s693 = scalar_lea.hbm %s4, %s692
          %s694 = sshll.u32 %s668, 4
          %s695 = int_to_ptr.vmem [resolvable:$true] %s694
          %700 = dma.vmem_to_hbm [thread:$0]  %s695, 1024, %s693, %s665, 64, 64, 4
        $region48: #{tpu_custom_call.1} parent=31 // pred_fallthru
          _
      $region32: #{tpu_custom_call.1} parent=5 // pred_fallthru
        _
      %p701 = scmp.le.s32.totalorder 2, %s21
      // Predicated region
      $region49: #{tpu_custom_call.1} parent=5 // pred_check
        %p702 = pneg %p701
      $region50: #{tpu_custom_call.1} parent=5 // pred_check_branch
        %704 = sbr.rel (%p702) target = $region52
      $region51: #{tpu_custom_call.1} parent=5 // pred_region
        %s705 = ssub.s32 %s21, 2
        // Predicated region
        $region53: #{tpu_custom_call.1} parent=51 // pred_check
          %p706 = pneg %p118
        $region54: #{tpu_custom_call.1} parent=51 // pred_check_branch
          %708 = sbr.rel (%p706) target = $region56
        $region55: #{tpu_custom_call.1} parent=51 // pred_region
          %s709 = sand.u32 %s103, 1
          %s710 = scalar_lea.sflag [#allocation4], %s709
          %s711 = sand.u32 %s103, 1
          %s712 = smul.addr %s711, 64
          %s713 = scalar_lea.vmem [#allocation7], %s712
          %714 = dma.done %s710, 1024
        $region56: #{tpu_custom_call.1} parent=51 // pred_fallthru
          _
        // Predicated region
        $region57: #{tpu_custom_call.1} parent=51 // pred_check
          %p715 = pneg %p144
        $region58: #{tpu_custom_call.1} parent=51 // pred_check_branch
          %717 = sbr.rel (%p715) target = $region60
        $region59: #{tpu_custom_call.1} parent=51 // pred_region
          %s718 = sand.u32 %s129, 1
          %s719 = scalar_lea.sflag [#allocation9], %s718
          %s720 = sand.u32 %s129, 1
          %s721 = smul.addr %s720, 64
          %s722 = scalar_lea.vmem [#allocation8], %s721
          %723 = dma.done %s719, 1024
        $region60: #{tpu_custom_call.1} parent=51 // pred_fallthru
          _
      $region52: #{tpu_custom_call.1} parent=5 // pred_fallthru
        _
    $region6: #{tpu_custom_call.1} parent=1 // loop_footer
      %s25 = sadd.s32 1, %s21
    $region7: #{tpu_custom_call.1} parent=1 // loop_footer_branch
      %20 = sbr.rel target = $region3
    $region8: #{tpu_custom_call.1} parent=1 // loop_exit
      _
    %724 = vsyncpa [#allocation3], 1
    %s725 = scalar_lea.sflag [#allocation3], 1
    %726 = vsyncpa %s725, 1
    %727 = vsyncpa [#allocation6], 1
    %728 = vsyncpa [#allocation4], 1
    %s729 = scalar_lea.sflag [#allocation4], 1
    %730 = vsyncpa %s729, 1
    %731 = vsyncpa [#allocation9], 1
    %s732 = scalar_lea.sflag [#allocation9], 1
    %733 = vsyncpa %s732, 1

</llo_original>
